<compile_context>
chip_gen: v7x
topology: tpu7x:2x2x1
jax: 0.10.0
libtpu: 0.0.40
codegen_flags: <defaults>
</compile_context>

<pallas_src>
import math

import jax
import jax.numpy as jnp
from jax.experimental import pallas as pl
from jax.experimental.pallas import tpu as pltpu


def _patch_encoder_kernel(x_ref, w_ref, posb_ref, o_ref):
    # x_ref    : (TM, Kd)  patch rows (possibly bf16), lane-dense packed
    # w_ref    : (Kd, Nd)  (block-diagonal) projection weight, resident
    # posb_ref : (TM, Nd)  f32 position embedding + bias, pre-tiled, resident
    # o_ref    : (TM, Nd)
    proj = jnp.dot(x_ref[...], w_ref[...], preferred_element_type=jnp.float32)
    o_ref[...] = (proj + posb_ref[...]).astype(o_ref.dtype)


def patch_encoder(patch, weight_t, bias, pos_emb, *, mxu_dtype=jnp.bfloat16,
                  row_tile=None):
    """patch: (B, N, P); weight_t: (P, D); bias: (D,); pos_emb: (N, D).

    mxu_dtype: dtype for the MXU operand streams (default bf16; pass None for
               exact f32).  Accumulation and the pos+bias add are always f32.
    """
    B, N, P = patch.shape
    P2, D = weight_t.shape
    assert P2 == P and pos_emb.shape == (N, D) and bias.shape == (D,)
    out_dtype = patch.dtype

    # --- Lane-dense packing factor: pack L rows into one 128-lane output row. ---
    LANE = 128
    if D < LANE and LANE % D == 0 and N % (LANE // D) == 0:
        L = LANE // D
    else:
        L = 1
    Kd, Nd = L * P, L * D
    period = N // L                       # dense rows per position-table cycle

    # Fold bias into the position table once (exact, f32) and lay it out dense.
    posb = pos_emb.astype(jnp.float32) + bias.astype(jnp.float32)[None, :]  # (N, D)
    posb_dense = posb.reshape(period, Nd)

    # Block-diagonal weight so the matmul emits lane-dense (L*D)-wide rows.
    if L > 1:
        eye = jnp.eye(L, dtype=weight_t.dtype)
        w_dense = jnp.einsum("ij,pd->ipjd", eye, weight_t).reshape(Kd, Nd)
    else:
        w_dense = weight_t

    # MXU input compression (default bf16); epilogue stays f32.
    if mxu_dtype is not None:
        x_in = patch.astype(mxu_dtype)
        w_in = w_dense.astype(mxu_dtype)
    else:
        x_in, w_in = patch, w_dense
    in_item = jnp.dtype(x_in.dtype).itemsize
    out_item = jnp.dtype(out_dtype).itemsize

    # Wrapper-side flatten to lane-dense rows (same row-major memory, free).
    R = (B * N) // L
    x_dense = x_in.reshape(R, Kd)

    # --- Row-tile selection: ~2 MiB of in+out traffic per step, VMEM-budgeted. ---
    row_quantum = (8 * period) // math.gcd(8, period)   # (8,·) tiling & pos period

    def _vmem_need(t):
        # double-buffered in/out/posb blocks + (conservatively doubled) weight
        return 2 * t * (Kd * in_item + Nd * out_item + Nd * 4) + 2 * Kd * Nd * in_item

    if row_tile is None:
        TARGET_STEP_BYTES = 2 << 20
        bytes_per_row = Kd * in_item + Nd * out_item
        tm = max(row_quantum,
                 (TARGET_STEP_BYTES // bytes_per_row) // row_quantum * row_quantum)
        if tm >= R:
            if R >= 2 * row_quantum:
                # keep >= 2 "parallel" steps so v7x's second TensorCore has work
                half = -(-R // 2)
                tm = -(-half // row_quantum) * row_quantum
            else:
                tm = R                      # tiny problem: single step, no padding
        VMEM_BUDGET = 24 << 20              # headroom vs. v7x 32 MiB scoped default
        while tm > row_quantum and _vmem_need(tm) > VMEM_BUDGET:
            tm = max(row_quantum, ((tm // 2) // row_quantum) * row_quantum)
    else:
        tm = row_tile
    TM = tm
    assert TM % period == 0, "row tile must be a multiple of the position period"

    # Pad rows up to a multiple of TM (padded rows are discarded afterwards).
    n_steps = -(-R // TM)
    R_pad = n_steps * TM
    if R_pad != R:
        x_dense = jnp.pad(x_dense, ((0, R_pad - R), (0, 0)))

    # Pre-tile pos+bias to one full (TM, Nd) block: plain aligned add in-kernel.
    posb_tile = jnp.tile(posb_dense, (TM // period, 1))

    flops = 2 * B * N * P * D
    bytes_accessed = (x_dense.size * in_item + w_in.size * in_item
                      + posb_tile.size * 4 + R_pad * Nd * out_item)

    grid_spec = pltpu.PrefetchScalarGridSpec(
        num_scalar_prefetch=0,
        grid=(R_pad // TM,),
        in_specs=[
            pl.BlockSpec((TM, Kd), lambda i: (i, 0)),   # patch rows, streamed
            pl.BlockSpec((Kd, Nd), lambda i: (0, 0)),   # weight, resident
            pl.BlockSpec((TM, Nd), lambda i: (0, 0)),   # pos+bias tile, resident
        ],
        out_specs=pl.BlockSpec((TM, Nd), lambda i: (i, 0)),
    )

    out = pl.pallas_call(
        _patch_encoder_kernel,
        out_shape=jax.ShapeDtypeStruct((R_pad, Nd), out_dtype),
        grid_spec=grid_spec,
        cost_estimate=pl.CostEstimate(
            flops=flops, transcendentals=0, bytes_accessed=bytes_accessed),
        compiler_params=pltpu.CompilerParams(
            dimension_semantics=("parallel",),
            vmem_limit_bytes=32 * 1024 * 1024,
        ),
    )(x_dense, w_in, posb_tile)

    # Slice off padding and restore (B, N, D) (same row-major memory, free).
    return out[:R].reshape(B, N, D)


if __name__ == "__main__":
    # Small shapes consistent with the module:
    #   num_patches=8, patch_dim=48, projection_dim=32, batch=2
    B, N, P, D = 2, 8, 48, 32

    key = jax.random.PRNGKey(0)
    k_x, k_w, k_b, k_pos = jax.random.split(key, 4)

    patch = jax.random.normal(k_x, (B, N, P), dtype=jnp.float32)
    weight_t = jax.random.normal(k_w, (P, D), dtype=jnp.float32) * 0.02
    bias = jax.random.normal(k_b, (D,), dtype=jnp.float32) * 0.02
    pos_emb = jax.random.normal(k_pos, (N, D), dtype=jnp.float32) * 0.02

    # Pure-JAX reference of the forward semantics.
    ref = (jnp.einsum("bnp,pd->bnd", patch, weight_t)
           + bias[None, None, :] + pos_emb[None, :, :])

    # Exact f32 path.
    out_f32 = jax.block_until_ready(
        patch_encoder(patch, weight_t, bias, pos_emb, mxu_dtype=None))
    assert out_f32.shape == (B, N, D)
    assert jnp.allclose(out_f32, ref, atol=1e-5, rtol=1e-5)

    # Default bf16-input path (f32 accumulation): looser tolerance vs f32 ref.
    out_bf16 = jax.block_until_ready(patch_encoder(patch, weight_t, bias, pos_emb))
    assert out_bf16.shape == (B, N, D)
    assert jnp.allclose(out_bf16, ref, atol=1e-2, rtol=1e-2)

    print("KERNEL_OK")
</pallas_src>

<mosaic_0001>
module attributes {stable_mosaic.version = 11 : i64} {
  func.func @_patch_encoder_kernel(%arg0: i32, %arg1: memref<4x192xf32, #tpu.memory_space<vmem>>, %arg2: memref<192x128xf32, #tpu.memory_space<vmem>>, %arg3: memref<4x128xf32, #tpu.memory_space<vmem>>, %arg4: memref<4x128xf32, #tpu.memory_space<vmem>>) attributes {dimension_semantics = [#tpu.dimension_semantics<parallel>], iteration_bounds = array<i64: 1>, scalar_prefetch = 0 : i64, scratch_operands = 0 : i64, tpu.core_type = #tpu.core_type<tc>, window_params = [{transform_indices = @transform_0, window_bounds = array<i64: 4, 192>}, {pipeline_mode = #tpu.pipeline_mode<synchronous>, transform_indices = @transform_1, window_bounds = array<i64: 192, 128>}, {pipeline_mode = #tpu.pipeline_mode<synchronous>, transform_indices = @transform_2, window_bounds = array<i64: 4, 128>}, {transform_indices = @transform_3, window_bounds = array<i64: 4, 128>}]} {
    %c0 = arith.constant 0 : index
    %c0_0 = arith.constant 0 : index
    %0 = vector.load %arg1[%c0, %c0_0] : memref<4x192xf32, #tpu.memory_space<vmem>>, vector<4x192xf32>
    %c0_1 = arith.constant 0 : index
    %c0_2 = arith.constant 0 : index
    %1 = vector.load %arg2[%c0_1, %c0_2] : memref<192x128xf32, #tpu.memory_space<vmem>>, vector<192x128xf32>
    %cst = arith.constant dense<0.000000e+00> : vector<4x128xf32>
    %2 = tpu.matmul %0, %1, %cst {dimension_numbers = #tpu.dot_dimension_numbers<[1], [0], [0], [1], [0, 0, 1, 1], [], []>} : vector<4x192xf32>, vector<192x128xf32>, vector<4x128xf32> -> vector<4x128xf32>
    %c0_3 = arith.constant 0 : index
    %c0_4 = arith.constant 0 : index
    %3 = vector.load %arg3[%c0_3, %c0_4] : memref<4x128xf32, #tpu.memory_space<vmem>>, vector<4x128xf32>
    %4 = arith.addf %2, %3 : vector<4x128xf32>
    %c0_5 = arith.constant 0 : index
    %c0_6 = arith.constant 0 : index
    %5 = vector.load %arg4[%c0_5, %c0_6] : memref<4x128xf32, #tpu.memory_space<vmem>>, vector<4x128xf32>
    tpu.vector_store %arg4[%c0_5, %c0_6], %4 {strides = array<i32>} : memref<4x128xf32, #tpu.memory_space<vmem>>, vector<4x128xf32>,
    return
  }
  func.func @transform_0(%arg0: i32) -> (i32, i32) {
    %c0_i32 = arith.constant 0 : i32
    %c0_i32_0 = arith.constant 0 : i32
    return %arg0, %c0_i32 : i32, i32
  }
  func.func @transform_1(%arg0: i32) -> (i32, i32) {
    %c0_i32 = arith.constant 0 : i32
    %c0_i32_0 = arith.constant 0 : i32
    %c0_i32_1 = arith.constant 0 : i32
    return %c0_i32, %c0_i32_0 : i32, i32
  }
  func.func @transform_2(%arg0: i32) -> (i32, i32) {
    %c0_i32 = arith.constant 0 : i32
    %c0_i32_0 = arith.constant 0 : i32
    %c0_i32_1 = arith.constant 0 : i32
    return %c0_i32, %c0_i32_0 : i32, i32
  }
  func.func @transform_3(%arg0: i32) -> (i32, i32) {
    %c0_i32 = arith.constant 0 : i32
    %c0_i32_0 = arith.constant 0 : i32
    return %arg0, %c0_i32 : i32, i32
  }
}

</mosaic_0001>

<llo_original>
// kernel: tpu_custom_call.1
$region0: #{tpu_custom_call.1}
  #allocation0 [shape = 'u32[]', space=smem, size = 0x4, offset = 0x4, fixed_abs, tag = 'smem constant byte address 0x4 - core index']
  #allocation1 [shape = 'u32[144,128]{1,0:T(1,128)}', space=vmem, size = 0x12000, scoped, tag = 'internal scratch']
  %s0 = inlined_call_operand.hbm [shape: f32[4,192], index: 0, kind: input, shape index: {}]
  %s1 = inlined_call_operand.hbm [shape: f32[192,128], index: 1, kind: input, shape index: {}]
  %s2 = inlined_call_operand.vmem [shape: f32[4,128], index: 2, kind: input, shape index: {}]
  %s3 = inlined_call_operand.hbm [shape: f32[4,128], index: 3, kind: output, shape index: {}]
  %s4 = sld [smem:[#allocation0]]
  $region30: #{tpu_custom_call.1} parent=0
    _
  %s6 = ssub.s32 1, %s4
  %s7 = scalar_select 0, %s6, %s4
  $region1: #{tpu_custom_call.1} parent=0
    #allocation2 [shape = 'u8[4096]{0}', space=vmem, size = 0x1000, scoped, tag = 'input window, operand 0, single buffered']
    #allocation3 [shape = 's32[1]{0}', space=sflag, size = 0x4, scoped, tag = 'scoped memory for tpu_custom_call.1']
    #allocation4 [shape = 's32[1]{0}', space=sflag, size = 0x4, scoped, tag = 'scoped memory for tpu_custom_call.1']
    #allocation5 [shape = 'u8[98304]{0}', space=vmem, size = 0x18000, scoped, tag = 'input window, operand 1, single buffered']
    #allocation6 [shape = 's32[1]{0}', space=sflag, size = 0x4, scoped, tag = 'scoped memory for tpu_custom_call.1']
    #allocation7 [shape = 'u8[2048]{0}', space=vmem, size = 0x800, scoped, tag = 'output window, operand 0, single buffered']
    %8 = vsyncpa [#allocation3], 0
    %9 = vsyncpa [#allocation6], 0
    %10 = vsyncpa [#allocation4], 0
    // Predicated region
    $region2: #{tpu_custom_call.1} parent=1 // pred_check
      _
    $region3: #{tpu_custom_call.1} parent=1 // pred_check_branch
      %12 = sbr.rel (0) target = $region5
    $region4: #{tpu_custom_call.1} parent=1 // pred_region
      %s14 = ssub.s32 128, 128
      %15 = vsyncadd [#allocation3], %s14
      %s17 = sshll.u32 [#allocation2], 4
      %s18 = int_to_ptr.vmem [resolvable:$true] %s17
      %20 = dma.hbm_to_vmem [thread:$0]  %s0, 128, %s18, [#allocation3]
    $region5: #{tpu_custom_call.1} parent=1 // pred_fallthru
      _
    // Predicated region
    $region6: #{tpu_custom_call.1} parent=1 // pred_check
      _
    $region7: #{tpu_custom_call.1} parent=1 // pred_check_branch
      %22 = sbr.rel (0) target = $region9
    $region8: #{tpu_custom_call.1} parent=1 // pred_region
      %s24 = ssub.s32 3072, 3072
      %25 = vsyncadd [#allocation6], %s24
      %s26 = sshll.u32 [#allocation5], 4
      %s27 = int_to_ptr.vmem [resolvable:$true] %s26
      %32 = dma.hbm_to_vmem [thread:$0]  %s1, 3072, %s27, [#allocation6], 128, 128, 8
    $region9: #{tpu_custom_call.1} parent=1 // pred_fallthru
      _
    // Predicated region
    $region10: #{tpu_custom_call.1} parent=1 // pred_check
      _
    $region11: #{tpu_custom_call.1} parent=1 // pred_check_branch
      %34 = sbr.rel (0) target = $region13
    $region12: #{tpu_custom_call.1} parent=1 // pred_region
      _
    $region13: #{tpu_custom_call.1} parent=1 // pred_fallthru
      _
    // Predicated region
    $region14: #{tpu_custom_call.1} parent=1 // pred_check
      _
    $region15: #{tpu_custom_call.1} parent=1 // pred_check_branch
      %36 = sbr.rel (0) target = $region17
    $region16: #{tpu_custom_call.1} parent=1 // pred_region
      %37 = dma.done [#allocation3], 128
    $region17: #{tpu_custom_call.1} parent=1 // pred_fallthru
      _
    // Predicated region
    $region18: #{tpu_custom_call.1} parent=1 // pred_check
      _
    $region19: #{tpu_custom_call.1} parent=1 // pred_check_branch
      %39 = sbr.rel (0) target = $region21
    $region20: #{tpu_custom_call.1} parent=1 // pred_region
      %40 = dma.done [#allocation6], 3072
    $region21: #{tpu_custom_call.1} parent=1 // pred_fallthru
      _
    %v41 = vld [vmem:[#allocation2] sm:$0xff]
    %v42 = vld [vmem:[#allocation5] sm:$0xff]
    %v43 = vld [vmem:[#allocation5 + $0x8] sm:$0xff]
    %v44 = vld [vmem:[#allocation5 + $0x10] sm:$0xff]
    %v45 = vld [vmem:[#allocation5 + $0x18] sm:$0xff]
    %v46 = vld [vmem:[#allocation5 + $0x20] sm:$0xff]
    %v47 = vld [vmem:[#allocation5 + $0x28] sm:$0xff]
    %v48 = vld [vmem:[#allocation5 + $0x30] sm:$0xff]
    %v49 = vld [vmem:[#allocation5 + $0x38] sm:$0xff]
    %v50 = vld [vmem:[#allocation5 + $0x40] sm:$0xff]
    %v51 = vld [vmem:[#allocation5 + $0x48] sm:$0xff]
    %v52 = vld [vmem:[#allocation5 + $0x50] sm:$0xff]
    %v53 = vld [vmem:[#allocation5 + $0x58] sm:$0xff]
    %v54 = vld [vmem:[#allocation5 + $0x60] sm:$0xff]
    %v55 = vld [vmem:[#allocation5 + $0x68] sm:$0xff]
    %v56 = vld [vmem:[#allocation5 + $0x70] sm:$0xff]
    %v57 = vld [vmem:[#allocation5 + $0x78] sm:$0xff]
    %v58 = vld [vmem:[#allocation5 + $0x80] sm:$0xff]
    %v59 = vld [vmem:[#allocation5 + $0x88] sm:$0xff]
    %v60 = vld [vmem:[#allocation5 + $0x90] sm:$0xff]
    %v61 = vld [vmem:[#allocation5 + $0x98] sm:$0xff]
    %v62 = vld [vmem:[#allocation5 + $0xa0] sm:$0xff]
    %v63 = vld [vmem:[#allocation5 + $0xa8] sm:$0xff]
    %v64 = vld [vmem:[#allocation5 + $0xb0] sm:$0xff]
    %v65 = vld [vmem:[#allocation5 + $0xb8] sm:$0xff]
    %v66 = vld [vmem:[%s2] sm:$0xf]
    %v68 = vcombine.high %v41, %v41
    %vm69 = vcmask 523264
    %v70 = vsel %vm69, %v68, 0
    %72 = vmatprep.subr.mxu0 0.0
    %73 = vmatpush1.msra.mxu0 %v42
    %74 = vmatprep.subr.mxu0 0.0
    %75 = vmatpush1.msra.mxu0 %v43
    %76 = vmatprep.subr.mxu0 0.0
    %77 = vmatpush1.msra.mxu0 %v44
    %78 = vmatprep.subr.mxu0 0.0
    %79 = vmatpush1.msra.mxu0 %v45
    %80 = vmatprep.subr.mxu0 0.0
    %81 = vmatpush1.msra.mxu0 %v46
    %82 = vmatprep.subr.mxu0 0.0
    %83 = vmatpush1.msra.mxu0 %v47
    %84 = vmatprep.subr.mxu0 0.0
    %85 = vmatpush1.msra.mxu0 %v48
    %86 = vmatprep.subr.mxu0 0.0
    %87 = vmatpush1.msra.mxu0 %v49
    %88 = vmatprep.subr.mxu0 0.0
    %89 = vmatpush1.msra.mxu0 %v50
    %90 = vmatprep.subr.mxu0 0.0
    %91 = vmatpush1.msra.mxu0 %v51
    %92 = vmatprep.subr.mxu0 0.0
    %93 = vmatpush1.msra.mxu0 %v52
    %94 = vmatprep.subr.mxu0 0.0
    %95 = vmatpush1.msra.mxu0 %v53
    %96 = vmatprep.subr.mxu0 0.0
    %97 = vmatpush1.msra.mxu0 %v54
    %98 = vmatprep.subr.mxu0 0.0
    %99 = vmatpush1.msra.mxu0 %v55
    %100 = vmatprep.subr.mxu0 0.0
    %101 = vmatpush1.msra.mxu0 %v56
    %102 = vmatprep.subr.mxu0 0.0
    %103 = vmatpush1.msra.mxu0 %v57
    %104 = vmatprep.subr.mxu0 0.0
    %105 = vmatpush1.msra.mxu0 %v58
    %106 = vmatprep.subr.mxu0 0.0
    %107 = vmatpush1.msra.mxu0 %v59
    %108 = vmatprep.subr.mxu0 0.0
    %109 = vmatpush1.msra.mxu0 %v60
    %110 = vmatprep.subr.mxu0 0.0
    %111 = vmatpush1.msra.mxu0 %v61
    %112 = vmatprep.subr.mxu0 0.0
    %113 = vmatpush1.msra.mxu0 %v62
    %114 = vmatprep.subr.mxu0 0.0
    %115 = vmatpush1.msra.mxu0 %v63
    %116 = vmatprep.subr.mxu0 0.0
    %117 = vmatpush1.msra.mxu0 %v64
    %118 = vmatprep.subr.mxu0 0.0
    %119 = vmatpush1.msra.mxu0 %v65
    %120 = vmatprep.subr.mxu0 0.0
    %121 = vmatpush1.msra.mxu0 0.0
    %122 = vmatprep.subr.mxu0 0.0
    %123 = vmatpush1.msra.mxu0 0.0
    %124 = vmatprep.subr.mxu0 0.0
    %125 = vmatpush1.msra.mxu0 0.0
    %126 = vmatprep.subr.mxu0 0.0
    %127 = vmatpush1.msra.mxu0 0.0
    %128 = vmatprep.subr.mxu0 0.0
    %129 = vmatpush1.msra.mxu0 0.0
    %130 = vmatprep.subr.mxu0 0.0
    %131 = vmatpush1.msra.mxu0 0.0
    %132 = vmatprep.subr.mxu0 0.0
    %133 = vmatpush1.msra.mxu0 0.0
    %134 = vmatprep.subr.mxu0 0.0
    %135 = vmatpush1.msra.mxu0 0.0
    %136 = vmatprep.mubr.f32.mxu0 %v70
    %137 = vmatmul.mubr.f32.gmra.mrb[0].mxu0 %v41
    %v138 = vpop.f32.mrb[0].mxu0
    %v139 = vadd.f32 %v66, %v138
    %v140 = vpop.f32.mrb[0].mxu0
    %141 = vdwg.mxu0
    %142 = vst [vmem:[#allocation7] sm:$0xf] %v139
    // Predicated region
    $region22: #{tpu_custom_call.1} parent=1 // pred_check
      _
    $region23: #{tpu_custom_call.1} parent=1 // pred_check_branch
      %144 = sbr.rel (0) target = $region25
    $region24: #{tpu_custom_call.1} parent=1 // pred_region
      %s146 = ssub.s32 64, 64
      %147 = vsyncadd [#allocation4], %s146
      %s149 = sshll.u32 [#allocation7], 4
      %s150 = int_to_ptr.vmem [resolvable:$true] %s149
      %152 = dma.vmem_to_hbm [thread:$0]  %s150, 64, %s3, [#allocation4]
    $region25: #{tpu_custom_call.1} parent=1 // pred_fallthru
      _
    // Predicated region
    $region26: #{tpu_custom_call.1} parent=1 // pred_check
      _
    $region27: #{tpu_custom_call.1} parent=1 // pred_check_branch
      %154 = sbr.rel (0) target = $region29
    $region28: #{tpu_custom_call.1} parent=1 // pred_region
      %155 = dma.done [#allocation4], 64
    $region29: #{tpu_custom_call.1} parent=1 // pred_fallthru
      _
    %156 = vsyncpa [#allocation3], 1
    %157 = vsyncpa [#allocation6], 1
    %158 = vsyncpa [#allocation4], 1

</llo_original>
